<compile_context>
chip_gen: v7x
topology: tpu7x:2x2x1
jax: 0.10.0
libtpu: 0.0.40
codegen_flags: <defaults>
</compile_context>

<pallas_src>
import functools

import numpy as np
import jax
import jax.numpy as jnp
from jax import lax
from jax.experimental import pallas as pl
from jax.experimental.pallas import tpu as pltpu


# ----------------------------------------------------------------------------
# Fused kernel: layer1 GRUs + (fc1 folded) + layer2 GRU + (fc2+fc3 folded head)
# ----------------------------------------------------------------------------
def _fused_old_gru_kernel(x_ref, slab1_ref, slab2_ref, slab3_ref, out_ref,
                          *, B, W, D, C, H1, H3, NC):
    f32 = jnp.float32
    DH1, DC = D * H1, D * C
    G1, G2 = 3 * DH1, 3 * H3
    WNC = W * NC

    # ---- unpack the 3 parameter slabs (static slices of VMEM refs) ----
    # slab1 rows: [0,DH1)      W1comb = [W1hh block-diag | W12 (fc1 folded)]
    #             [DH1,DH1+DC) W1ih block-diag (cols 0:G1)
    #             DH1+DC       b1_gx  (b_ih, + b_hh for r,z gates)
    #             DH1+DC+1     b1hh_n (cols 0:DH1)
    w1comb = slab1_ref[0:DH1, :]                               # (DH1, G1+G2)
    w1ih = slab1_ref[DH1:DH1 + DC, 0:G1]                       # (DC, G1)
    b1gx = slab1_ref[DH1 + DC:DH1 + DC + 1, 0:G1]              # (1, G1)
    b1hhn = slab1_ref[DH1 + DC + 1:DH1 + DC + 2, 0:DH1]        # (1, DH1)
    # slab2 rows: [0,H3) W2hh (gates on lanes), H3 b2_gx, H3+1 b2hh_n.
    w2hh = slab2_ref[0:H3, :]                                  # (H3, G2)
    b2gx = slab2_ref[H3:H3 + 1, :]                             # (1, G2)
    b2hhn = slab2_ref[H3 + 1:H3 + 2, 0:H3]                     # (1, H3)
    # slab3 rows: [0,H3) W_head (fc2 folded into fc3), [H3,H3+W) diag mask,
    #             [H3+W,H3+W+WNC) block-sum fold, last row b_head.
    whead = slab3_ref[0:H3, 0:WNC]                             # (H3, WNC)
    hmask = slab3_ref[H3:H3 + W, 0:WNC]                        # (W, WNC)
    hfold = slab3_ref[H3 + W:H3 + W + WNC, 0:NC]               # (WNC, NC)
    bhead = slab3_ref[H3 + W + WNC:H3 + W + WNC + 1, 0:NC]     # (1, NC)

    # ---- layer 1: hoisted input projection (all time steps, one matmul) ----
    gx1 = jnp.dot(x_ref[...], w1ih, preferred_element_type=f32) + b1gx  # (B*W, G1)

    # ---- layer 1 recurrence: one packed matmul per step (t=0 skips it) ----
    gx2 = [None] * B          # fc1-folded layer-2 input projections (pre-bias)
    h1 = None
    for t in range(B):
        g = gx1[t * W:(t + 1) * W, :]                          # (W, G1)
        if t == 0:            # h == 0  ->  gh == 0, no recurrent matmul
            r = jax.nn.sigmoid(g[:, 0:DH1])
            z = jax.nn.sigmoid(g[:, DH1:2 * DH1])
            n = jnp.tanh(g[:, 2 * DH1:G1] + r * b1hhn)
            h1 = (1.0 - z) * n
        else:
            # one push: layer-1 gates for step t AND layer-2 gx for step t-1
            full = jnp.dot(h1, w1comb, preferred_element_type=f32)  # (W, G1+G2)
            gx2[t - 1] = full[:, G1:G1 + G2]
            r = jax.nn.sigmoid(g[:, 0:DH1] + full[:, 0:DH1])
            z = jax.nn.sigmoid(g[:, DH1:2 * DH1] + full[:, DH1:2 * DH1])
            n = jnp.tanh(g[:, 2 * DH1:G1] + r * (full[:, 2 * DH1:G1] + b1hhn))
            h1 = (1.0 - z) * n + z * h1
    gx2[B - 1] = jnp.dot(h1, w1comb[:, G1:G1 + G2],
                         preferred_element_type=f32)           # (W, G2)

    # ---- layer 2 recurrence (fc1 folded into gx2, gates on lanes) ----
    h2s = []
    h2 = None
    for t in range(B):
        g = gx2[t] + b2gx                                      # (W, G2)
        if t == 0:
            r = jax.nn.sigmoid(g[:, 0:H3])
            z = jax.nn.sigmoid(g[:, H3:2 * H3])
            n = jnp.tanh(g[:, 2 * H3:G2] + r * b2hhn)
            h2 = (1.0 - z) * n
        else:
            gh = jnp.dot(h2, w2hh, preferred_element_type=f32)  # (W, G2)
            r = jax.nn.sigmoid(g[:, 0:H3] + gh[:, 0:H3])
            z = jax.nn.sigmoid(g[:, H3:2 * H3] + gh[:, H3:2 * H3])
            n = jnp.tanh(g[:, 2 * H3:G2] + r * (gh[:, 2 * H3:G2] + b2hhn))
            h2 = (1.0 - z) * n + z * h2
        h2s.append(h2)

    # ---- head: fc2 folded into fc3 ----
    # out[t] = b_head + sum_w h2[t, w] @ W_head[w]:
    #   one (B*W,H3)@(H3,W*NC) matmul, diagonal-block mask + sublane reduce
    #   per step, then one (B,W*NC)@(W*NC,NC) fold matmul; single store.
    h2all = jnp.concatenate(h2s, axis=0)                       # (B*W, H3)
    p_all = jnp.dot(h2all, whead, preferred_element_type=f32)  # (B*W, WNC)
    rows = [jnp.sum(p_all[t * W:(t + 1) * W, :] * hmask, axis=0, keepdims=True)
            for t in range(B)]
    rowcat = jnp.concatenate(rows, axis=0)                     # (B, WNC)
    out_ref[...] = jnp.dot(rowcat, hfold, preferred_element_type=f32) + bhead


# ----------------------------------------------------------------------------
# Wrapper: single fused grid-less pallas_call (everything VMEM-resident)
# ----------------------------------------------------------------------------
def old_gru_forward(x, kp):
    """x: (B, W, D, C) float32; kp: dict of 3 packed slabs. Returns (B, NC)."""
    B, W, D, C = x.shape
    G2 = kp['slab2'].shape[1]
    H3 = G2 // 3
    G1 = kp['slab1'].shape[1] - G2
    H1 = G1 // (3 * D)
    NC = kp['slab3'].shape[1] // W

    x_packed = x.reshape(B * W, D * C)      # row t*W+w, col d*C+k

    kernel = functools.partial(_fused_old_gru_kernel,
                               B=B, W=W, D=D, C=C, H1=H1, H3=H3, NC=NC)
    vmem = pl.BlockSpec(memory_space=pltpu.MemorySpace.VMEM)
    return pl.pallas_call(
        kernel,
        out_shape=jax.ShapeDtypeStruct((B, NC), jnp.float32),
        in_specs=[vmem] * 4,
        out_specs=vmem,
    )(x_packed, kp['slab1'], kp['slab2'], kp['slab3'])


# ----------------------------------------------------------------------------
# Parameters: PyTorch-layout init + host-side packing/folding (float64 numpy)
# ----------------------------------------------------------------------------
def init_torch_params(key, *, W, D, C, NC, H1, H2, H3, H4):
    keys = jax.random.split(key, 14)

    def u(k, shape, scale=0.1):
        return jax.random.uniform(k, shape, jnp.float32, -scale, scale)

    F = D * H2
    return dict(
        w1ih=u(keys[0], (D, 3 * H1, C)),   w1hh=u(keys[1], (D, 3 * H1, H1)),
        b1ih=u(keys[2], (D, 3 * H1)),      b1hh=u(keys[3], (D, 3 * H1)),
        fc1w=u(keys[4], (D, H2, H1)),      fc1b=u(keys[5], (D, H2)),
        w2ih=u(keys[6], (3 * H3, F)),      w2hh=u(keys[7], (3 * H3, H3)),
        b2ih=u(keys[8], (3 * H3,)),        b2hh=u(keys[9], (3 * H3,)),
        fc2w=u(keys[10], (H4, H3)),        fc2b=u(keys[11], (H4,)),
        fc3w=u(keys[12], (NC, H4 * W)),    fc3b=u(keys[13], (NC,)),
    )


def to_kernel_params(tp, W):
    """Block-diagonal + gate-lane packing and exact linear-layer folds."""
    tp = {k: np.asarray(v, np.float64) for k, v in tp.items()}
    D, threeH1, C = tp['w1ih'].shape
    H1 = threeH1 // 3
    H2 = tp['fc1w'].shape[1]
    H3 = tp['w2hh'].shape[1]
    H4 = tp['fc2w'].shape[0]
    NC = tp['fc3w'].shape[0]
    DH1, DC = D * H1, D * C
    G1, G2 = 3 * DH1, 3 * H3
    WNC = W * NC

    # --- layer 1: block-diagonal over descriptors, gate-major lane packing ---
    w1ih_blk = np.zeros((DC, G1))
    w1hh_blk = np.zeros((DH1, G1))
    b1_gx = np.zeros((1, G1))
    b1hh_n = np.zeros((1, DH1))
    w12_blk = np.zeros((DH1, G2))           # fc1 folded into layer-2 W_ih
    for d in range(D):
        for g in range(3):                  # gate order: r, z, n
            col = g * DH1 + d * H1
            w1ih_blk[d * C:(d + 1) * C, col:col + H1] = \
                tp['w1ih'][d, g * H1:(g + 1) * H1, :].T
            w1hh_blk[d * H1:(d + 1) * H1, col:col + H1] = \
                tp['w1hh'][d, g * H1:(g + 1) * H1, :].T
            b = tp['b1ih'][d, g * H1:(g + 1) * H1].copy()
            if g < 2:                       # fold b_hh into hoisted gx (r, z)
                b = b + tp['b1hh'][d, g * H1:(g + 1) * H1]
            b1_gx[0, col:col + H1] = b
        b1hh_n[0, d * H1:(d + 1) * H1] = tp['b1hh'][d, 2 * H1:3 * H1]
        for g in range(3):                  # W12[dH1+i, gH3+j] = fc1wᵀ · w2ihᵀ
            w2s = tp['w2ih'][g * H3:(g + 1) * H3, d * H2:(d + 1) * H2]
            w12_blk[d * H1:(d + 1) * H1, g * H3:(g + 1) * H3] = \
                tp['fc1w'][d].T @ w2s.T
    w1comb = np.concatenate([w1hh_blk, w12_blk], axis=1)       # (DH1, G1+G2)

    # --- layer 2: gates on lanes; fc1 bias folded through w2ih ---
    w2hh_blk = np.zeros((H3, G2))
    b2_gx = np.zeros((1, G2))
    for g in range(3):
        w2hh_blk[:, g * H3:(g + 1) * H3] = tp['w2hh'][g * H3:(g + 1) * H3, :].T
        b = (tp['b2ih'][g * H3:(g + 1) * H3]
             + tp['w2ih'][g * H3:(g + 1) * H3, :] @ tp['fc1b'].reshape(-1))
        if g < 2:
            b = b + tp['b2hh'][g * H3:(g + 1) * H3]
        b2_gx[0, g * H3:(g + 1) * H3] = b
    b2hh_n = tp['b2hh'][2 * H3:3 * H3][None, :]

    # --- head: fc2 folded into fc3 ---
    w_head = np.zeros((H3, WNC))
    b_head = tp['fc3b'].copy()
    for w in range(W):
        f3 = tp['fc3w'][:, w * H4:(w + 1) * H4]                # (NC, H4)
        w_head[:, w * NC:(w + 1) * NC] = tp['fc2w'].T @ f3.T    # (H3, NC)
        b_head = b_head + f3 @ tp['fc2b']
    b_head = b_head[None, :]
    mask = np.repeat(np.eye(W), NC, axis=1)                     # (W, W*NC)
    fold = np.tile(np.eye(NC), (W, 1))                          # (W*NC, NC)

    # --- pack everything into 3 DMA slabs ---
    def pad_cols(a, width):
        out = np.zeros((a.shape[0], width))
        out[:, :a.shape[1]] = a
        return out

    slab1 = np.concatenate([w1comb,
                            pad_cols(w1ih_blk, G1 + G2),
                            pad_cols(b1_gx, G1 + G2),
                            pad_cols(b1hh_n, G1 + G2)], axis=0)
    slab2 = np.concatenate([w2hh_blk, b2_gx, pad_cols(b2hh_n, G2)], axis=0)
    slab3 = np.concatenate([w_head, mask, pad_cols(fold, WNC),
                            pad_cols(b_head, WNC)], axis=0)
    return dict(slab1=jnp.asarray(slab1, jnp.float32),
                slab2=jnp.asarray(slab2, jnp.float32),
                slab3=jnp.asarray(slab3, jnp.float32))


# ----------------------------------------------------------------------------
# Pure-JAX reference mirroring the PyTorch forward (full-precision matmuls)
# ----------------------------------------------------------------------------
_HI = jax.lax.Precision.HIGHEST


def _hdot(a, b):
    return jnp.dot(a, b, precision=_HI)


def _gru_ref(x_seq, wih, whh, bih, bhh):
    H = whh.shape[1]

    def cell(h, x_t):
        gi = _hdot(x_t, wih.T) + bih
        gh = _hdot(h, whh.T) + bhh
        r = jax.nn.sigmoid(gi[:, :H] + gh[:, :H])
        z = jax.nn.sigmoid(gi[:, H:2 * H] + gh[:, H:2 * H])
        n = jnp.tanh(gi[:, 2 * H:] + r * gh[:, 2 * H:])
        h = (1.0 - z) * n + z * h
        return h, h

    h0 = jnp.zeros((x_seq.shape[1], H), jnp.float32)
    _, hs = lax.scan(cell, h0, x_seq)
    return hs


def old_gru_reference(x, tp):
    B, W, D, C = x.shape
    outs = []
    for i in range(D):
        t = x[:, :, i, :]
        h = _gru_ref(t, tp['w1ih'][i], tp['w1hh'][i], tp['b1ih'][i], tp['b1hh'][i])
        outs.append(_hdot(h, tp['fc1w'][i].T) + tp['fc1b'][i])
    concat = jnp.concatenate(outs, axis=2)
    h2 = _gru_ref(concat, tp['w2ih'], tp['w2hh'], tp['b2ih'], tp['b2hh'])
    y = _hdot(h2, tp['fc2w'].T) + tp['fc2b']     # (B, W, H4); dropout = identity
    flat = y.reshape(B, -1)                      # Flatten(start_dim=1, end_dim=2)
    return _hdot(flat, tp['fc3w'].T) + tp['fc3b']


if __name__ == "__main__":
    # Small config: seq_len B=2, num_windows W=8, num_descriptors D=4,
    # num_columns C=3, num_classes=5, hidden sizes 16/8/16/8,
    # bidirectional flags False, dropout inactive at inference.
    B, W, D, C = 2, 8, 4, 3
    NC, H1, H2, H3, H4 = 5, 16, 8, 16, 8

    key = jax.random.PRNGKey(0)
    kp_key, kx_key = jax.random.split(key)
    torch_p = init_torch_params(kp_key, W=W, D=D, C=C, NC=NC,
                                H1=H1, H2=H2, H3=H3, H4=H4)
    kern_p = to_kernel_params(torch_p, W)
    x = jax.random.normal(kx_key, (B, W, D, C), jnp.float32)

    fwd = jax.jit(old_gru_forward)
    y = jax.block_until_ready(fwd(x, kern_p))
    y_ref = old_gru_reference(x, torch_p)

    assert y.shape == (B, NC), y.shape
    assert jnp.allclose(y, y_ref, atol=5e-4, rtol=5e-4), (y, y_ref)
    print("KERNEL_OK")
</pallas_src>

<mosaic_0001>
module attributes {stable_mosaic.version = 11 : i64} {
  func.func @_fused_old_gru_kernel(%arg0: memref<16x12xf32, #tpu.memory_space<vmem>>, %arg1: memref<78x240xf32, #tpu.memory_space<vmem>>, %arg2: memref<18x48xf32, #tpu.memory_space<vmem>>, %arg3: memref<65x40xf32, #tpu.memory_space<vmem>>, %arg4: memref<2x5xf32, #tpu.memory_space<vmem>>) attributes {dimension_semantics = [], scalar_prefetch = 0 : i64, scratch_operands = 0 : i64, tpu.core_type = #tpu.core_type<tc>} {
    %c0 = arith.constant 0 : index
    %c0_0 = arith.constant 0 : index
    %0 = vector.load %arg1[%c0, %c0_0] : memref<78x240xf32, #tpu.memory_space<vmem>>, vector<64x240xf32>
    %c64 = arith.constant 64 : index
    %c0_1 = arith.constant 0 : index
    %1 = vector.load %arg1[%c64, %c0_1] : memref<78x240xf32, #tpu.memory_space<vmem>>, vector<12x192xf32>
    %c76 = arith.constant 76 : index
    %c0_2 = arith.constant 0 : index
    %2 = vector.load %arg1[%c76, %c0_2] : memref<78x240xf32, #tpu.memory_space<vmem>>, vector<1x192xf32>
    %c77 = arith.constant 77 : index
    %c0_3 = arith.constant 0 : index
    %3 = vector.load %arg1[%c77, %c0_3] : memref<78x240xf32, #tpu.memory_space<vmem>>, vector<1x64xf32>
    %c0_4 = arith.constant 0 : index
    %c0_5 = arith.constant 0 : index
    %4 = vector.load %arg2[%c0_4, %c0_5] : memref<18x48xf32, #tpu.memory_space<vmem>>, vector<16x48xf32>
    %c16 = arith.constant 16 : index
    %c0_6 = arith.constant 0 : index
    %5 = vector.load %arg2[%c16, %c0_6] : memref<18x48xf32, #tpu.memory_space<vmem>>, vector<1x48xf32>
    %c17 = arith.constant 17 : index
    %c0_7 = arith.constant 0 : index
    %6 = vector.load %arg2[%c17, %c0_7] : memref<18x48xf32, #tpu.memory_space<vmem>>, vector<1x16xf32>
    %c0_8 = arith.constant 0 : index
    %c0_9 = arith.constant 0 : index
    %7 = vector.load %arg3[%c0_8, %c0_9] : memref<65x40xf32, #tpu.memory_space<vmem>>, vector<16x40xf32>
    %c16_10 = arith.constant 16 : index
    %c0_11 = arith.constant 0 : index
    %8 = vector.load %arg3[%c16_10, %c0_11] : memref<65x40xf32, #tpu.memory_space<vmem>>, vector<8x40xf32>
    %c24 = arith.constant 24 : index
    %c0_12 = arith.constant 0 : index
    %9 = vector.load %arg3[%c24, %c0_12] : memref<65x40xf32, #tpu.memory_space<vmem>>, vector<40x5xf32>
    %c64_13 = arith.constant 64 : index
    %c0_14 = arith.constant 0 : index
    %10 = vector.load %arg3[%c64_13, %c0_14] : memref<65x40xf32, #tpu.memory_space<vmem>>, vector<1x5xf32>
    %c0_15 = arith.constant 0 : index
    %c0_16 = arith.constant 0 : index
    %11 = vector.load %arg0[%c0_15, %c0_16] : memref<16x12xf32, #tpu.memory_space<vmem>>, vector<16x12xf32>
    %cst = arith.constant dense<0.000000e+00> : vector<16x192xf32>
    %12 = tpu.matmul %11, %1, %cst {dimension_numbers = #tpu.dot_dimension_numbers<[1], [0], [0], [1], [0, 0, 1, 1], [], []>} : vector<16x12xf32>, vector<12x192xf32>, vector<16x192xf32> -> vector<16x192xf32>
    %13 = vector.broadcast %2 : vector<1x192xf32> to vector<16x192xf32>
    %14 = arith.addf %12, %13 : vector<16x192xf32>
    %15 = vector.extract_strided_slice %14 {offsets = [0, 0], sizes = [8, 192], strides = [1, 1]} : vector<16x192xf32> to vector<8x192xf32>
    %16 = vector.extract_strided_slice %15 {offsets = [0, 0], sizes = [8, 64], strides = [1, 1]} : vector<8x192xf32> to vector<8x64xf32>
    %17 = arith.negf %16 : vector<8x64xf32>
    %18 = math.exp %17 : vector<8x64xf32>
    %cst_17 = arith.constant 1.000000e+00 : f32
    %19 = vector.broadcast %cst_17 : f32 to vector<8x64xf32>
    %20 = arith.addf %19, %18 : vector<8x64xf32>
    %21 = arith.divf %19, %20 : vector<8x64xf32>
    %22 = vector.extract_strided_slice %15 {offsets = [0, 64], sizes = [8, 64], strides = [1, 1]} : vector<8x192xf32> to vector<8x64xf32>
    %23 = arith.negf %22 : vector<8x64xf32>
    %24 = math.exp %23 : vector<8x64xf32>
    %cst_18 = arith.constant 1.000000e+00 : f32
    %25 = vector.broadcast %cst_18 : f32 to vector<8x64xf32>
    %26 = arith.addf %25, %24 : vector<8x64xf32>
    %27 = arith.divf %25, %26 : vector<8x64xf32>
    %28 = vector.extract_strided_slice %15 {offsets = [0, 128], sizes = [8, 64], strides = [1, 1]} : vector<8x192xf32> to vector<8x64xf32>
    %29 = vector.broadcast %3 : vector<1x64xf32> to vector<8x64xf32>
    %30 = arith.mulf %21, %29 : vector<8x64xf32>
    %31 = arith.addf %28, %30 : vector<8x64xf32>
    %32 = math.tanh %31 : vector<8x64xf32>
    %cst_19 = arith.constant 1.000000e+00 : f32
    %33 = vector.broadcast %cst_19 : f32 to vector<8x64xf32>
    %34 = arith.subf %33, %27 : vector<8x64xf32>
    %35 = arith.mulf %34, %32 : vector<8x64xf32>
    %36 = vector.extract_strided_slice %14 {offsets = [8, 0], sizes = [8, 192], strides = [1, 1]} : vector<16x192xf32> to vector<8x192xf32>
    %cst_20 = arith.constant dense<0.000000e+00> : vector<8x240xf32>
    %37 = tpu.matmul %35, %0, %cst_20 {dimension_numbers = #tpu.dot_dimension_numbers<[1], [0], [0], [1], [0, 0, 1, 1], [], []>} : vector<8x64xf32>, vector<64x240xf32>, vector<8x240xf32> -> vector<8x240xf32>
    %38 = vector.extract_strided_slice %37 {offsets = [0, 192], sizes = [8, 48], strides = [1, 1]} : vector<8x240xf32> to vector<8x48xf32>
    %39 = vector.extract_strided_slice %36 {offsets = [0, 0], sizes = [8, 64], strides = [1, 1]} : vector<8x192xf32> to vector<8x64xf32>
    %40 = vector.extract_strided_slice %37 {offsets = [0, 0], sizes = [8, 64], strides = [1, 1]} : vector<8x240xf32> to vector<8x64xf32>
    %41 = arith.addf %39, %40 : vector<8x64xf32>
    %42 = arith.negf %41 : vector<8x64xf32>
    %43 = math.exp %42 : vector<8x64xf32>
    %cst_21 = arith.constant 1.000000e+00 : f32
    %44 = vector.broadcast %cst_21 : f32 to vector<8x64xf32>
    %45 = arith.addf %44, %43 : vector<8x64xf32>
    %46 = arith.divf %44, %45 : vector<8x64xf32>
    %47 = vector.extract_strided_slice %36 {offsets = [0, 64], sizes = [8, 64], strides = [1, 1]} : vector<8x192xf32> to vector<8x64xf32>
    %48 = vector.extract_strided_slice %37 {offsets = [0, 64], sizes = [8, 64], strides = [1, 1]} : vector<8x240xf32> to vector<8x64xf32>
    %49 = arith.addf %47, %48 : vector<8x64xf32>
    %50 = arith.negf %49 : vector<8x64xf32>
    %51 = math.exp %50 : vector<8x64xf32>
    %cst_22 = arith.constant 1.000000e+00 : f32
    %52 = vector.broadcast %cst_22 : f32 to vector<8x64xf32>
    %53 = arith.addf %52, %51 : vector<8x64xf32>
    %54 = arith.divf %52, %53 : vector<8x64xf32>
    %55 = vector.extract_strided_slice %36 {offsets = [0, 128], sizes = [8, 64], strides = [1, 1]} : vector<8x192xf32> to vector<8x64xf32>
    %56 = vector.extract_strided_slice %37 {offsets = [0, 128], sizes = [8, 64], strides = [1, 1]} : vector<8x240xf32> to vector<8x64xf32>
    %57 = vector.broadcast %3 : vector<1x64xf32> to vector<8x64xf32>
    %58 = arith.addf %56, %57 : vector<8x64xf32>
    %59 = arith.mulf %46, %58 : vector<8x64xf32>
    %60 = arith.addf %55, %59 : vector<8x64xf32>
    %61 = math.tanh %60 : vector<8x64xf32>
    %cst_23 = arith.constant 1.000000e+00 : f32
    %62 = vector.broadcast %cst_23 : f32 to vector<8x64xf32>
    %63 = arith.subf %62, %54 : vector<8x64xf32>
    %64 = arith.mulf %63, %61 : vector<8x64xf32>
    %65 = arith.mulf %54, %35 : vector<8x64xf32>
    %66 = arith.addf %64, %65 : vector<8x64xf32>
    %67 = vector.extract_strided_slice %0 {offsets = [0, 192], sizes = [64, 48], strides = [1, 1]} : vector<64x240xf32> to vector<64x48xf32>
    %cst_24 = arith.constant dense<0.000000e+00> : vector<8x48xf32>
    %68 = tpu.matmul %66, %67, %cst_24 {dimension_numbers = #tpu.dot_dimension_numbers<[1], [0], [0], [1], [0, 0, 1, 1], [], []>} : vector<8x64xf32>, vector<64x48xf32>, vector<8x48xf32> -> vector<8x48xf32>
    %69 = vector.broadcast %5 : vector<1x48xf32> to vector<8x48xf32>
    %70 = arith.addf %38, %69 : vector<8x48xf32>
    %71 = vector.extract_strided_slice %70 {offsets = [0, 0], sizes = [8, 16], strides = [1, 1]} : vector<8x48xf32> to vector<8x16xf32>
    %72 = arith.negf %71 : vector<8x16xf32>
    %73 = math.exp %72 : vector<8x16xf32>
    %cst_25 = arith.constant 1.000000e+00 : f32
    %74 = vector.broadcast %cst_25 : f32 to vector<8x16xf32>
    %75 = arith.addf %74, %73 : vector<8x16xf32>
    %76 = arith.divf %74, %75 : vector<8x16xf32>
    %77 = vector.extract_strided_slice %70 {offsets = [0, 16], sizes = [8, 16], strides = [1, 1]} : vector<8x48xf32> to vector<8x16xf32>
    %78 = arith.negf %77 : vector<8x16xf32>
    %79 = math.exp %78 : vector<8x16xf32>
    %cst_26 = arith.constant 1.000000e+00 : f32
    %80 = vector.broadcast %cst_26 : f32 to vector<8x16xf32>
    %81 = arith.addf %80, %79 : vector<8x16xf32>
    %82 = arith.divf %80, %81 : vector<8x16xf32>
    %83 = vector.extract_strided_slice %70 {offsets = [0, 32], sizes = [8, 16], strides = [1, 1]} : vector<8x48xf32> to vector<8x16xf32>
    %84 = vector.broadcast %6 : vector<1x16xf32> to vector<8x16xf32>
    %85 = arith.mulf %76, %84 : vector<8x16xf32>
    %86 = arith.addf %83, %85 : vector<8x16xf32>
    %87 = math.tanh %86 : vector<8x16xf32>
    %cst_27 = arith.constant 1.000000e+00 : f32
    %88 = vector.broadcast %cst_27 : f32 to vector<8x16xf32>
    %89 = arith.subf %88, %82 : vector<8x16xf32>
    %90 = arith.mulf %89, %87 : vector<8x16xf32>
    %91 = vector.broadcast %5 : vector<1x48xf32> to vector<8x48xf32>
    %92 = arith.addf %68, %91 : vector<8x48xf32>
    %cst_28 = arith.constant dense<0.000000e+00> : vector<8x48xf32>
    %93 = tpu.matmul %90, %4, %cst_28 {dimension_numbers = #tpu.dot_dimension_numbers<[1], [0], [0], [1], [0, 0, 1, 1], [], []>} : vector<8x16xf32>, vector<16x48xf32>, vector<8x48xf32> -> vector<8x48xf32>
    %94 = vector.extract_strided_slice %92 {offsets = [0, 0], sizes = [8, 16], strides = [1, 1]} : vector<8x48xf32> to vector<8x16xf32>
    %95 = vector.extract_strided_slice %93 {offsets = [0, 0], sizes = [8, 16], strides = [1, 1]} : vector<8x48xf32> to vector<8x16xf32>
    %96 = arith.addf %94, %95 : vector<8x16xf32>
    %97 = arith.negf %96 : vector<8x16xf32>
    %98 = math.exp %97 : vector<8x16xf32>
    %cst_29 = arith.constant 1.000000e+00 : f32
    %99 = vector.broadcast %cst_29 : f32 to vector<8x16xf32>
    %100 = arith.addf %99, %98 : vector<8x16xf32>
    %101 = arith.divf %99, %100 : vector<8x16xf32>
    %102 = vector.extract_strided_slice %92 {offsets = [0, 16], sizes = [8, 16], strides = [1, 1]} : vector<8x48xf32> to vector<8x16xf32>
    %103 = vector.extract_strided_slice %93 {offsets = [0, 16], sizes = [8, 16], strides = [1, 1]} : vector<8x48xf32> to vector<8x16xf32>
    %104 = arith.addf %102, %103 : vector<8x16xf32>
    %105 = arith.negf %104 : vector<8x16xf32>
    %106 = math.exp %105 : vector<8x16xf32>
    %cst_30 = arith.constant 1.000000e+00 : f32
    %107 = vector.broadcast %cst_30 : f32 to vector<8x16xf32>
    %108 = arith.addf %107, %106 : vector<8x16xf32>
    %109 = arith.divf %107, %108 : vector<8x16xf32>
    %110 = vector.extract_strided_slice %92 {offsets = [0, 32], sizes = [8, 16], strides = [1, 1]} : vector<8x48xf32> to vector<8x16xf32>
    %111 = vector.extract_strided_slice %93 {offsets = [0, 32], sizes = [8, 16], strides = [1, 1]} : vector<8x48xf32> to vector<8x16xf32>
    %112 = vector.broadcast %6 : vector<1x16xf32> to vector<8x16xf32>
    %113 = arith.addf %111, %112 : vector<8x16xf32>
    %114 = arith.mulf %101, %113 : vector<8x16xf32>
    %115 = arith.addf %110, %114 : vector<8x16xf32>
    %116 = math.tanh %115 : vector<8x16xf32>
    %cst_31 = arith.constant 1.000000e+00 : f32
    %117 = vector.broadcast %cst_31 : f32 to vector<8x16xf32>
    %118 = arith.subf %117, %109 : vector<8x16xf32>
    %119 = arith.mulf %118, %116 : vector<8x16xf32>
    %120 = arith.mulf %109, %90 : vector<8x16xf32>
    %121 = arith.addf %119, %120 : vector<8x16xf32>
    %122 = tpu.concatenate %90, %121 in 0 : vector<8x16xf32>, vector<8x16xf32> -> vector<16x16xf32>
    %cst_32 = arith.constant dense<0.000000e+00> : vector<16x40xf32>
    %123 = tpu.matmul %122, %7, %cst_32 {dimension_numbers = #tpu.dot_dimension_numbers<[1], [0], [0], [1], [0, 0, 1, 1], [], []>} : vector<16x16xf32>, vector<16x40xf32>, vector<16x40xf32> -> vector<16x40xf32>
    %124 = vector.extract_strided_slice %123 {offsets = [0, 0], sizes = [8, 40], strides = [1, 1]} : vector<16x40xf32> to vector<8x40xf32>
    %125 = arith.mulf %124, %8 : vector<8x40xf32>
    %cst_33 = arith.constant dense<0.000000e+00> : vector<40xf32>
    %126 = vector.multi_reduction <add>, %125, %cst_33 [0] : vector<8x40xf32> to vector<40xf32>
    %127 = vector.shape_cast %126 : vector<40xf32> to vector<1x40xf32>
    %128 = vector.extract_strided_slice %123 {offsets = [8, 0], sizes = [8, 40], strides = [1, 1]} : vector<16x40xf32> to vector<8x40xf32>
    %129 = arith.mulf %128, %8 : vector<8x40xf32>
    %cst_34 = arith.constant dense<0.000000e+00> : vector<40xf32>
    %130 = vector.multi_reduction <add>, %129, %cst_34 [0] : vector<8x40xf32> to vector<40xf32>
    %131 = vector.shape_cast %130 : vector<40xf32> to vector<1x40xf32>
    %132 = tpu.concatenate %127, %131 in 0 : vector<1x40xf32>, vector<1x40xf32> -> vector<2x40xf32>
    %cst_35 = arith.constant dense<0.000000e+00> : vector<2x5xf32>
    %133 = tpu.matmul %132, %9, %cst_35 {dimension_numbers = #tpu.dot_dimension_numbers<[1], [0], [0], [1], [0, 0, 1, 1], [], []>} : vector<2x40xf32>, vector<40x5xf32>, vector<2x5xf32> -> vector<2x5xf32>
    %134 = vector.broadcast %10 : vector<1x5xf32> to vector<2x5xf32>
    %135 = arith.addf %133, %134 : vector<2x5xf32>
    %c0_36 = arith.constant 0 : index
    %c0_37 = arith.constant 0 : index
    %136 = vector.load %arg4[%c0_36, %c0_37] : memref<2x5xf32, #tpu.memory_space<vmem>>, vector<2x5xf32>
    tpu.vector_store %arg4[%c0_36, %c0_37], %135 {strides = array<i32>} : memref<2x5xf32, #tpu.memory_space<vmem>>, vector<2x5xf32>,
    return
  }
}

</mosaic_0001>

<llo_original>
// kernel: old_gru_forward.1
$region0: #{old_gru_forward.1}
  #allocation0 [shape = 'u32[]', space=smem, size = 0x4, offset = 0x4, fixed_abs, tag = 'smem constant byte address 0x4 - core index']
  #allocation1 [shape = 'u32[144,128]{1,0:T(1,128)}', space=vmem, size = 0x12000, scoped, tag = 'internal scratch']
  %s0 = inlined_call_operand.vmem [shape: f32[16,12], index: 0, kind: input, shape index: {}]
  %s1 = inlined_call_operand.vmem [shape: f32[78,240], index: 1, kind: input, shape index: {}]
  %s2 = inlined_call_operand.vmem [shape: f32[18,48], index: 2, kind: input, shape index: {}]
  %s3 = inlined_call_operand.vmem [shape: f32[65,40], index: 3, kind: input, shape index: {}]
  %s4 = inlined_call_operand.hbm [shape: f32[2,5], index: 4, kind: output, shape index: {}]
  %s5 = sld [smem:[#allocation0]]
  $region26: #{old_gru_forward.1} parent=0
    _
  %s7 = ssub.s32 1, %s5
  %s8 = scalar_select 0, %s7, %s5
  $region1: #{old_gru_forward.1} parent=0
    #allocation2 [shape = 'u8[1024]{0}', space=vmem, size = 0x400, scoped, tag = 'output window, operand 0, single buffered']
    #allocation3 [shape = 's32[1]{0}', space=sflag, size = 0x4, scoped, tag = 'scoped memory for old_gru_forward.1']
    %9 = vsyncpa [#allocation3], 0
    // Predicated region
    $region2: #{old_gru_forward.1} parent=1 // pred_check
      _
    $region3: #{old_gru_forward.1} parent=1 // pred_check_branch
      %11 = sbr.rel (0) target = $region5
    $region4: #{old_gru_forward.1} parent=1 // pred_region
      _
    $region5: #{old_gru_forward.1} parent=1 // pred_fallthru
      _
    // Predicated region
    $region6: #{old_gru_forward.1} parent=1 // pred_check
      _
    $region7: #{old_gru_forward.1} parent=1 // pred_check_branch
      %13 = sbr.rel (0) target = $region9
    $region8: #{old_gru_forward.1} parent=1 // pred_region
      _
    $region9: #{old_gru_forward.1} parent=1 // pred_fallthru
      _
    // Predicated region
    $region10: #{old_gru_forward.1} parent=1 // pred_check
      _
    $region11: #{old_gru_forward.1} parent=1 // pred_check_branch
      %15 = sbr.rel (0) target = $region13
    $region12: #{old_gru_forward.1} parent=1 // pred_region
      _
    $region13: #{old_gru_forward.1} parent=1 // pred_fallthru
      _
    // Predicated region
    $region14: #{old_gru_forward.1} parent=1 // pred_check
      _
    $region15: #{old_gru_forward.1} parent=1 // pred_check_branch
      %17 = sbr.rel (0) target = $region17
    $region16: #{old_gru_forward.1} parent=1 // pred_region
      _
    $region17: #{old_gru_forward.1} parent=1 // pred_fallthru
      _
    %v18 = vld [vmem:[%s1] sm:$0xff]
    %v19 = vld [vmem:[%s1 + $0x8] sm:$0xff]
    %v20 = vld [vmem:[%s1 + $0x10] sm:$0xff]
    %v21 = vld [vmem:[%s1 + $0x18] sm:$0xff]
    %v22 = vld [vmem:[%s1 + $0x20] sm:$0xff]
    %v23 = vld [vmem:[%s1 + $0x28] sm:$0xff]
    %v24 = vld [vmem:[%s1 + $0x30] sm:$0xff]
    %v25 = vld [vmem:[%s1 + $0x38] sm:$0xff]
    %v26 = vld [vmem:[%s1 + $0x40] sm:$0xff]
    %v27 = vld [vmem:[%s1 + $0x48] sm:$0xff]
    %v28 = vld [vmem:[%s1 + $0x50] sm:$0xff]
    %v29 = vld [vmem:[%s1 + $0x58] sm:$0xff]
    %v30 = vld [vmem:[%s1 + $0x60] sm:$0xff]
    %v31 = vld [vmem:[%s1 + $0x68] sm:$0xff]
    %v32 = vld [vmem:[%s1 + $0x70] sm:$0xff]
    %v33 = vld [vmem:[%s1 + $0x78] sm:$0xff]
    %v34 = vld [vmem:[%s1 + $0x80] sm:$0xff]
    %v35 = vld [vmem:[%s1 + $0x88] sm:$0xff]
    %v36 = vld [vmem:[%s1 + $0x90] sm:$0xf]
    %v37 = vld [vmem:[%s1 + $0x98] sm:$0xf]
    %s38 = scalar_lea.vmem %s1, 148
    %v39 = vld [vmem:[%s38] ss:$8 sm:$0x3]
    %v40 = vld [vmem:[%s1 + $0x95] ss:$0 sm:$0xff]
    %v41 = vld [vmem:[%s2] sm:$0xff]
    %v42 = vld [vmem:[%s2 + $0x8] sm:$0xff]
    %v43 = vld [vmem:[%s2 + $0x10] sm:$0x1]
    %v44 = vld [vmem:[%s2 + $0x11] sm:$0x1]
    %v45 = vld [vmem:[%s3] sm:$0xff]
    %v46 = vld [vmem:[%s3 + $0x8] sm:$0xff]
    %v47 = vld [vmem:[%s3 + $0x10] sm:$0xff]
    %v48 = vld [vmem:[%s3 + $0x18] sm:$0xff]
    %v49 = vld [vmem:[%s3 + $0x20] sm:$0xff]
    %v50 = vld [vmem:[%s3 + $0x28] sm:$0xff]
    %v51 = vld [vmem:[%s3 + $0x30] sm:$0xff]
    %v52 = vld [vmem:[%s3 + $0x38] sm:$0xff]
    %v53 = vld [vmem:[%s3 + $0x40] sm:$0x1]
    %v54 = vld [vmem:[%s0] sm:$0xff]
    %v55 = vld [vmem:[%s0 + $0x8] sm:$0xff]
    %v57 = vlaneseq
    %v58 = vshrl.u32 %v57, 7
    %v59 = vsub.s32 0, %v58
    %v60 = vrot.slane %v39, %v59
    %v61 = vlaneseq
    %v62 = vshrl.u32 %v61, 7
    %v63 = vsub.s32 1, %v62
    %v64 = vrot.slane %v39, %v63
    %vm67 = vcmask 97280
    %v69 = vsel %vm67, %v54, 0
    %v72 = vsel %vm67, %v55, 0
    %vm74 = vcmask 1043456
    %v76 = vsel %vm74, %v36, 0
    %v79 = vsel %vm74, %v37, 0
    %81 = vmatprep.subr.mxu0 %v35
    %82 = vmatpush1.msra.mxu0 %v34
    %83 = vmatprep.subr.mxu0 %v79
    %84 = vmatpush1.msra.mxu0 %v76
    %85 = vmatprep.subr.mxu0 0.0
    %86 = vmatpush1.msra.mxu0 0.0
    %87 = vmatprep.subr.mxu0 0.0
    %88 = vmatpush1.msra.mxu0 0.0
    %89 = vmatprep.subr.mxu0 0.0
    %90 = vmatpush1.msra.mxu0 0.0
    %91 = vmatprep.subr.mxu0 0.0
    %92 = vmatpush1.msra.mxu0 0.0
    %93 = vmatprep.subr.mxu0 0.0
    %94 = vmatpush1.msra.mxu0 0.0
    %95 = vmatprep.subr.mxu0 0.0
    %96 = vmatpush1.msra.mxu0 0.0
    %97 = vmatprep.subr.mxu0 0.0
    %98 = vmatpush1.msra.mxu0 0.0
    %99 = vmatprep.subr.mxu0 0.0
    %100 = vmatpush1.msra.mxu0 0.0
    %101 = vmatprep.subr.mxu0 0.0
    %102 = vmatpush1.msra.mxu0 0.0
    %103 = vmatprep.subr.mxu0 0.0
    %104 = vmatpush1.msra.mxu0 0.0
    %105 = vmatprep.subr.mxu0 0.0
    %106 = vmatpush1.msra.mxu0 0.0
    %107 = vmatprep.subr.mxu0 0.0
    %108 = vmatpush1.msra.mxu0 0.0
    %109 = vmatprep.subr.mxu0 0.0
    %110 = vmatpush1.msra.mxu0 0.0
    %111 = vmatprep.subr.mxu0 0.0
    %112 = vmatpush1.msra.mxu0 0.0
    %113 = vmatprep.subr.mxu0 0.0
    %114 = vmatpush1.msra.mxu0 0.0
    %115 = vmatprep.subr.mxu0 0.0
    %116 = vmatpush1.msra.mxu0 0.0
    %117 = vmatprep.subr.mxu0 0.0
    %118 = vmatpush1.msra.mxu0 0.0
    %119 = vmatprep.subr.mxu0 0.0
    %120 = vmatpush1.msra.mxu0 0.0
    %121 = vmatprep.subr.mxu0 0.0
    %122 = vmatpush1.msra.mxu0 0.0
    %123 = vmatprep.subr.mxu0 0.0
    %124 = vmatpush1.msra.mxu0 0.0
    %125 = vmatprep.subr.mxu0 0.0
    %126 = vmatpush1.msra.mxu0 0.0
    %127 = vmatprep.subr.mxu0 0.0
    %128 = vmatpush1.msra.mxu0 0.0
    %129 = vmatprep.subr.mxu0 0.0
    %130 = vmatpush1.msra.mxu0 0.0
    %131 = vmatprep.subr.mxu0 0.0
    %132 = vmatpush1.msra.mxu0 0.0
    %133 = vmatprep.subr.mxu0 0.0
    %134 = vmatpush1.msra.mxu0 0.0
    %135 = vmatprep.subr.mxu0 0.0
    %136 = vmatpush1.msra.mxu0 0.0
    %137 = vmatprep.subr.mxu0 0.0
    %138 = vmatpush1.msra.mxu0 0.0
    %139 = vmatprep.subr.mxu0 0.0
    %140 = vmatpush1.msra.mxu0 0.0
    %141 = vmatprep.subr.mxu0 0.0
    %142 = vmatpush1.msra.mxu0 0.0
    %143 = vmatprep.subr.mxu0 0.0
    %144 = vmatpush1.msra.mxu0 0.0
    %145 = vmatprep.mubr.f32.mxu0 0.0
    %146 = vmatmul.mubr.f32.gmra.mrb[0].mxu0 %v69
    %v147 = vpop.f32.mrb[0].mxu0
    %v148 = vadd.f32 %v60, %v147
    %v149 = vpop.f32.mrb[0].mxu0
    %v150 = vadd.f32 %v64, %v149
    %151 = vmatprep.mubr.f32.mxu0 0.0
    %152 = vmatmul.mubr.f32.gmra.mrb[0].mxu0 %v72
    %v153 = vpop.f32.mrb[0].mxu0
    %v154 = vadd.f32 %v60, %v153
    %v155 = vpop.f32.mrb[0].mxu0
    %v156 = vadd.f32 %v64, %v155
    %157 = vdwg.mxu0
    %v158 = vxor.u32 %v148, 2147483648
    %v159 = vmul.f32 %v158, 1.442695
    %v160 = vpow.pop %v159
    %v161 = vadd.f32 %v160, 1.0
    %v162 = vrcp.pop %v161
    %v163 = vmul.f32 1.0, %v162
    %v164 = vmul.f32 %v163, %v40
    %v165 = vadd.f32 %v150, %v164
    %v166 = vtanh.pop %v165
    %v167 = vsub.f32 1.0, %v163
    %169 = vrot.lane.b32.xlu0 %v166, 64
    %v170 = vpop.permute.xlu0 %169
    %v172 = vmul.f32 %v167, %v170
    %174 = vrot.lane.b32.xlu0 %v172, 64
    %v175 = vpop.permute.xlu0 %174
    %vm176 = vcmask 523264
    %v177 = vsel %vm176, %v175, 0
    %179 = vmatprep.subr.mxu0 %v19
    %180 = vmatpush1.msra.mxu0 %v18
    %181 = vmatprep.subr.mxu0 %v21
    %182 = vmatpush1.msra.mxu0 %v20
    %183 = vmatprep.subr.mxu0 %v23
    %184 = vmatpush1.msra.mxu0 %v22
    %185 = vmatprep.subr.mxu0 %v25
    %186 = vmatpush1.msra.mxu0 %v24
    %187 = vmatprep.subr.mxu0 %v27
    %188 = vmatpush1.msra.mxu0 %v26
    %189 = vmatprep.subr.mxu0 %v29
    %190 = vmatpush1.msra.mxu0 %v28
    %191 = vmatprep.subr.mxu0 %v31
    %192 = vmatpush1.msra.mxu0 %v30
    %193 = vmatprep.subr.mxu0 %v33
    %194 = vmatpush1.msra.mxu0 %v32
    %195 = vmatprep.subr.mxu0 0.0
    %196 = vmatpush1.msra.mxu0 0.0
    %197 = vmatprep.subr.mxu0 0.0
    %198 = vmatpush1.msra.mxu0 0.0
    %199 = vmatprep.subr.mxu0 0.0
    %200 = vmatpush1.msra.mxu0 0.0
    %201 = vmatprep.subr.mxu0 0.0
    %202 = vmatpush1.msra.mxu0 0.0
    %203 = vmatprep.subr.mxu0 0.0
    %204 = vmatpush1.msra.mxu0 0.0
    %205 = vmatprep.subr.mxu0 0.0
    %206 = vmatpush1.msra.mxu0 0.0
    %207 = vmatprep.subr.mxu0 0.0
    %208 = vmatpush1.msra.mxu0 0.0
    %209 = vmatprep.subr.mxu0 0.0
    %210 = vmatpush1.msra.mxu0 0.0
    %211 = vmatprep.subr.mxu0 0.0
    %212 = vmatpush1.msra.mxu0 0.0
    %213 = vmatprep.subr.mxu0 0.0
    %214 = vmatpush1.msra.mxu0 0.0
    %215 = vmatprep.subr.mxu0 0.0
    %216 = vmatpush1.msra.mxu0 0.0
    %217 = vmatprep.subr.mxu0 0.0
    %218 = vmatpush1.msra.mxu0 0.0
    %219 = vmatprep.subr.mxu0 0.0
    %220 = vmatpush1.msra.mxu0 0.0
    %221 = vmatprep.subr.mxu0 0.0
    %222 = vmatpush1.msra.mxu0 0.0
    %223 = vmatprep.subr.mxu0 0.0
    %224 = vmatpush1.msra.mxu0 0.0
    %225 = vmatprep.subr.mxu0 0.0
    %226 = vmatpush1.msra.mxu0 0.0
    %227 = vmatprep.subr.mxu0 0.0
    %228 = vmatpush1.msra.mxu0 0.0
    %229 = vmatprep.subr.mxu0 0.0
    %230 = vmatpush1.msra.mxu0 0.0
    %231 = vmatprep.subr.mxu0 0.0
    %232 = vmatpush1.msra.mxu0 0.0
    %233 = vmatprep.subr.mxu0 0.0
    %234 = vmatpush1.msra.mxu0 0.0
    %235 = vmatprep.subr.mxu0 0.0
    %236 = vmatpush1.msra.mxu0 0.0
    %237 = vmatprep.subr.mxu0 0.0
    %238 = vmatpush1.msra.mxu0 0.0
    %239 = vmatprep.subr.mxu0 0.0
    %240 = vmatpush1.msra.mxu0 0.0
    %241 = vmatprep.subr.mxu0 0.0
    %242 = vmatpush1.msra.mxu0 0.0
    %243 = vmatprep.mubr.f32.mxu0 0.0
    %244 = vmatmul.mubr.f32.gmra.mrb[0].mxu0 %v177
    %v245 = vpop.f32.mrb[0].mxu0
    %v246 = vadd.f32 0.0, %v245
    %v247 = vpop.f32.mrb[0].mxu0
    %v248 = vadd.f32 0.0, %v247
    %249 = vdwg.mxu0
    %v250 = vadd.f32 %v154, %v246
    %v251 = vxor.u32 %v250, 2147483648
    %v252 = vmul.f32 %v251, 1.442695
    %v253 = vpow.pop %v252
    %v254 = vadd.f32 %v253, 1.0
    %v255 = vrcp.pop %v254
    %v256 = vmul.f32 1.0, %v255
    %v257 = vadd.f32 %v248, %v40
    %v258 = vmul.f32 %v256, %v257
    %v259 = vadd.f32 %v156, %v258
    %v260 = vtanh.pop %v259
    %v261 = vsub.f32 1.0, %v256
    %263 = vrot.lane.b32.xlu0 %v260, 64
    %v264 = vpop.permute.xlu0 %263
    %v266 = vmul.f32 %v261, %v264
    %v267 = vmul.f32 %v256, %v172
    %v268 = vadd.f32 %v266, %v267
    %v269 = vlaneseq
    %v270 = vshrl.u32 %v269, 7
    %v271 = vsub.s32 0, %v270
    %v272 = vrot.slane %v43, %v271
    %274 = vrot.lane.b32.xlu0 %v272, 64
    %v275 = vpop.permute.xlu0 %274
    %v277 = vadd.f32 %v248, %v275
    %v278 = vxor.u32 %v277, 2147483648
    %v279 = vmul.f32 %v278, 1.442695
    %v280 = vpow.pop %v279
    %v281 = vadd.f32 %v280, 1.0
    %v282 = vrcp.pop %v281
    %v283 = vmul.f32 1.0, %v282
    %v284 = vlaneseq
    %v285 = vshrl.u32 %v284, 7
    %v286 = vsub.s32 0, %v285
    %v287 = vrot.slane %v44, %v286
    %289 = vrot.lane.b32.xlu0 %v287, 64
    %v290 = vpop.permute.xlu0 %289
    %v292 = vmul.f32 %v283, %v290
    %294 = vrot.lane.b32.xlu0 %v292, 32
    %v295 = vpop.permute.xlu0 %294
    %v297 = vadd.f32 %v277, %v295
    %v298 = vtanh.pop %v297
    %v299 = vsub.f32 1.0, %v283
    %301 = vrot.lane.b32.xlu0 %v298, 112
    %v302 = vpop.permute.xlu0 %301
    %v304 = vmul.f32 %v299, %v302
    %306 = vrot.lane.b32.xlu0 %v268, 64
    %v307 = vpop.permute.xlu0 %306
    %316 = vrot.lane.b32.xlu0 %v19, 64
    %v317 = vpop.permute.xlu0 %316
    %318 = vrot.lane.b32.xlu0 %v21, 64
    %v319 = vpop.permute.xlu0 %318
    %320 = vrot.lane.b32.xlu0 %v23, 64
    %v321 = vpop.permute.xlu0 %320
    %322 = vrot.lane.b32.xlu0 %v25, 64
    %v323 = vpop.permute.xlu0 %322
    %324 = vrot.lane.b32.xlu0 %v27, 64
    %v325 = vpop.permute.xlu0 %324
    %326 = vrot.lane.b32.xlu0 %v29, 64
    %v327 = vpop.permute.xlu0 %326
    %328 = vrot.lane.b32.xlu0 %v31, 64
    %v329 = vpop.permute.xlu0 %328
    %330 = vrot.lane.b32.xlu0 %v33, 64
    %v331 = vpop.permute.xlu0 %330
    %v340 = vsel %vm176, %v307, 0
    %342 = vmatprep.subr.mxu0 0.0
    %343 = vmatpush1.msra.mxu0 %v317
    %344 = vmatprep.subr.mxu0 0.0
    %345 = vmatpush1.msra.mxu0 %v319
    %346 = vmatprep.subr.mxu0 0.0
    %347 = vmatpush1.msra.mxu0 %v321
    %348 = vmatprep.subr.mxu0 0.0
    %349 = vmatpush1.msra.mxu0 %v323
    %350 = vmatprep.subr.mxu0 0.0
    %351 = vmatpush1.msra.mxu0 %v325
    %352 = vmatprep.subr.mxu0 0.0
    %353 = vmatpush1.msra.mxu0 %v327
    %354 = vmatprep.subr.mxu0 0.0
    %355 = vmatpush1.msra.mxu0 %v329
    %356 = vmatprep.subr.mxu0 0.0
    %357 = vmatpush1.msra.mxu0 %v331
    %358 = vmatprep.subr.mxu0 0.0
    %359 = vmatpush1.msra.mxu0 0.0
    %360 = vmatprep.subr.mxu0 0.0
    %361 = vmatpush1.msra.mxu0 0.0
    %362 = vmatprep.subr.mxu0 0.0
    %363 = vmatpush1.msra.mxu0 0.0
    %364 = vmatprep.subr.mxu0 0.0
    %365 = vmatpush1.msra.mxu0 0.0
    %366 = vmatprep.subr.mxu0 0.0
    %367 = vmatpush1.msra.mxu0 0.0
    %368 = vmatprep.subr.mxu0 0.0
    %369 = vmatpush1.msra.mxu0 0.0
    %370 = vmatprep.subr.mxu0 0.0
    %371 = vmatpush1.msra.mxu0 0.0
    %372 = vmatprep.subr.mxu0 0.0
    %373 = vmatpush1.msra.mxu0 0.0
    %374 = vmatprep.subr.mxu0 0.0
    %375 = vmatpush1.msra.mxu0 0.0
    %376 = vmatprep.subr.mxu0 0.0
    %377 = vmatpush1.msra.mxu0 0.0
    %378 = vmatprep.subr.mxu0 0.0
    %379 = vmatpush1.msra.mxu0 0.0
    %380 = vmatprep.subr.mxu0 0.0
    %381 = vmatpush1.msra.mxu0 0.0
    %382 = vmatprep.subr.mxu0 0.0
    %383 = vmatpush1.msra.mxu0 0.0
    %384 = vmatprep.subr.mxu0 0.0
    %385 = vmatpush1.msra.mxu0 0.0
    %386 = vmatprep.subr.mxu0 0.0
    %387 = vmatpush1.msra.mxu0 0.0
    %388 = vmatprep.subr.mxu0 0.0
    %389 = vmatpush1.msra.mxu0 0.0
    %390 = vmatprep.subr.mxu0 0.0
    %391 = vmatpush1.msra.mxu0 0.0
    %392 = vmatprep.subr.mxu0 0.0
    %393 = vmatpush1.msra.mxu0 0.0
    %394 = vmatprep.subr.mxu0 0.0
    %395 = vmatpush1.msra.mxu0 0.0
    %396 = vmatprep.subr.mxu0 0.0
    %397 = vmatpush1.msra.mxu0 0.0
    %398 = vmatprep.subr.mxu0 0.0
    %399 = vmatpush1.msra.mxu0 0.0
    %400 = vmatprep.subr.mxu0 0.0
    %401 = vmatpush1.msra.mxu0 0.0
    %402 = vmatprep.subr.mxu0 0.0
    %403 = vmatpush1.msra.mxu0 0.0
    %404 = vmatprep.subr.mxu0 0.0
    %405 = vmatpush1.msra.mxu0 0.0
    %406 = vmatprep.mubr.f32.mxu0 0.0
    %407 = vmatmul.mubr.f32.gmra.mrb[0].mxu0 %v340
    %v408 = vpop.f32.mrb[0].mxu0
    %v409 = vadd.f32 %v272, %v408
    %v410 = vpop.f32.mrb[0].mxu0
    %411 = vdwg.mxu0
    %413 = vrot.lane.b32.xlu0 %v304, 48
    %v414 = vpop.permute.xlu0 %413
    %vm415 = vcmask 130048
    %v416 = vsel %vm415, %v414, 0
    %418 = vmatprep.subr.mxu0 0.0
    %419 = vmatpush1.msra.mxu0 %v41
    %420 = vmatprep.subr.mxu0 0.0
    %421 = vmatpush1.msra.mxu0 %v42
    %422 = vmatprep.subr.mxu0 0.0
    %423 = vmatpush1.msra.mxu0 0.0
    %424 = vmatprep.subr.mxu0 0.0
    %425 = vmatpush1.msra.mxu0 0.0
    %426 = vmatprep.subr.mxu0 0.0
    %427 = vmatpush1.msra.mxu0 0.0
    %428 = vmatprep.subr.mxu0 0.0
    %429 = vmatpush1.msra.mxu0 0.0
    %430 = vmatprep.subr.mxu0 0.0
    %431 = vmatpush1.msra.mxu0 0.0
    %432 = vmatprep.subr.mxu0 0.0
    %433 = vmatpush1.msra.mxu0 0.0
    %434 = vmatprep.subr.mxu0 0.0
    %435 = vmatpush1.msra.mxu0 0.0
    %436 = vmatprep.subr.mxu0 0.0
    %437 = vmatpush1.msra.mxu0 0.0
    %438 = vmatprep.subr.mxu0 0.0
    %439 = vmatpush1.msra.mxu0 0.0
    %440 = vmatprep.subr.mxu0 0.0
    %441 = vmatpush1.msra.mxu0 0.0
    %442 = vmatprep.subr.mxu0 0.0
    %443 = vmatpush1.msra.mxu0 0.0
    %444 = vmatprep.subr.mxu0 0.0
    %445 = vmatpush1.msra.mxu0 0.0
    %446 = vmatprep.subr.mxu0 0.0
    %447 = vmatpush1.msra.mxu0 0.0
    %448 = vmatprep.subr.mxu0 0.0
    %449 = vmatpush1.msra.mxu0 0.0
    %450 = vmatprep.subr.mxu0 0.0
    %451 = vmatpush1.msra.mxu0 0.0
    %452 = vmatprep.subr.mxu0 0.0
    %453 = vmatpush1.msra.mxu0 0.0
    %454 = vmatprep.subr.mxu0 0.0
    %455 = vmatpush1.msra.mxu0 0.0
    %456 = vmatprep.subr.mxu0 0.0
    %457 = vmatpush1.msra.mxu0 0.0
    %458 = vmatprep.subr.mxu0 0.0
    %459 = vmatpush1.msra.mxu0 0.0
    %460 = vmatprep.subr.mxu0 0.0
    %461 = vmatpush1.msra.mxu0 0.0
    %462 = vmatprep.subr.mxu0 0.0
    %463 = vmatpush1.msra.mxu0 0.0
    %464 = vmatprep.subr.mxu0 0.0
    %465 = vmatpush1.msra.mxu0 0.0
    %466 = vmatprep.subr.mxu0 0.0
    %467 = vmatpush1.msra.mxu0 0.0
    %468 = vmatprep.subr.mxu0 0.0
    %469 = vmatpush1.msra.mxu0 0.0
    %470 = vmatprep.subr.mxu0 0.0
    %471 = vmatpush1.msra.mxu0 0.0
    %472 = vmatprep.subr.mxu0 0.0
    %473 = vmatpush1.msra.mxu0 0.0
    %474 = vmatprep.subr.mxu0 0.0
    %475 = vmatpush1.msra.mxu0 0.0
    %476 = vmatprep.subr.mxu0 0.0
    %477 = vmatpush1.msra.mxu0 0.0
    %478 = vmatprep.subr.mxu0 0.0
    %479 = vmatpush1.msra.mxu0 0.0
    %480 = vmatprep.subr.mxu0 0.0
    %481 = vmatpush1.msra.mxu0 0.0
    %482 = vmatprep.mubr.f32.mxu0 0.0
    %483 = vmatmul.mubr.f32.gmra.mrb[0].mxu0 %v416
    %v484 = vpop.f32.mrb[0].mxu0
    %v485 = vadd.f32 0.0, %v484
    %v486 = vpop.f32.mrb[0].mxu0
    %487 = vdwg.mxu0
    %v488 = vadd.f32 %v409, %v485
    %v489 = vxor.u32 %v488, 2147483648
    %v490 = vmul.f32 %v489, 1.442695
    %v491 = vpow.pop %v490
    %v492 = vadd.f32 %v491, 1.0
    %v493 = vrcp.pop %v492
    %v494 = vmul.f32 1.0, %v493
    %495 = vrot.lane.b32.xlu0 %v287, 32
    %v496 = vpop.permute.xlu0 %495
    %v498 = vadd.f32 %v485, %v496
    %500 = vrot.lane.b32.xlu0 %v498, 96
    %v501 = vpop.permute.xlu0 %500
    %v503 = vmul.f32 %v494, %v501
    %505 = vrot.lane.b32.xlu0 %v503, 32
    %v506 = vpop.permute.xlu0 %505
    %v508 = vadd.f32 %v409, %v506
    %v509 = vtanh.pop %v508
    %v510 = vsub.f32 1.0, %v494
    %512 = vrot.lane.b32.xlu0 %v509, 112
    %v513 = vpop.permute.xlu0 %512
    %v515 = vmul.f32 %v510, %v513
    %516 = vrot.lane.b32.xlu0 %v304, 64
    %v517 = vpop.permute.xlu0 %516
    %v519 = vmul.f32 %v494, %v517
    %v520 = vadd.f32 %v515, %v519
    %522 = vrot.lane.b32.xlu0 %v520, 64
    %v523 = vpop.permute.xlu0 %522
    %524 = vrot.lane.b32.xlu0 %v523, 48
    %v525 = vpop.permute.xlu0 %524
    %v526 = vsel %vm415, %v525, 0
    %528 = vmatprep.subr.mxu0 0.0
    %529 = vmatpush1.msra.mxu0 %v45
    %530 = vmatprep.subr.mxu0 0.0
    %531 = vmatpush1.msra.mxu0 %v46
    %532 = vmatprep.subr.mxu0 0.0
    %533 = vmatpush1.msra.mxu0 0.0
    %534 = vmatprep.subr.mxu0 0.0
    %535 = vmatpush1.msra.mxu0 0.0
    %536 = vmatprep.subr.mxu0 0.0
    %537 = vmatpush1.msra.mxu0 0.0
    %538 = vmatprep.subr.mxu0 0.0
    %539 = vmatpush1.msra.mxu0 0.0
    %540 = vmatprep.subr.mxu0 0.0
    %541 = vmatpush1.msra.mxu0 0.0
    %542 = vmatprep.subr.mxu0 0.0
    %543 = vmatpush1.msra.mxu0 0.0
    %544 = vmatprep.subr.mxu0 0.0
    %545 = vmatpush1.msra.mxu0 0.0
    %546 = vmatprep.subr.mxu0 0.0
    %547 = vmatpush1.msra.mxu0 0.0
    %548 = vmatprep.subr.mxu0 0.0
    %549 = vmatpush1.msra.mxu0 0.0
    %550 = vmatprep.subr.mxu0 0.0
    %551 = vmatpush1.msra.mxu0 0.0
    %552 = vmatprep.subr.mxu0 0.0
    %553 = vmatpush1.msra.mxu0 0.0
    %554 = vmatprep.subr.mxu0 0.0
    %555 = vmatpush1.msra.mxu0 0.0
    %556 = vmatprep.subr.mxu0 0.0
    %557 = vmatpush1.msra.mxu0 0.0
    %558 = vmatprep.subr.mxu0 0.0
    %559 = vmatpush1.msra.mxu0 0.0
    %560 = vmatprep.subr.mxu0 0.0
    %561 = vmatpush1.msra.mxu0 0.0
    %562 = vmatprep.subr.mxu0 0.0
    %563 = vmatpush1.msra.mxu0 0.0
    %564 = vmatprep.subr.mxu0 0.0
    %565 = vmatpush1.msra.mxu0 0.0
    %566 = vmatprep.subr.mxu0 0.0
    %567 = vmatpush1.msra.mxu0 0.0
    %568 = vmatprep.subr.mxu0 0.0
    %569 = vmatpush1.msra.mxu0 0.0
    %570 = vmatprep.subr.mxu0 0.0
    %571 = vmatpush1.msra.mxu0 0.0
    %572 = vmatprep.subr.mxu0 0.0
    %573 = vmatpush1.msra.mxu0 0.0
    %574 = vmatprep.subr.mxu0 0.0
    %575 = vmatpush1.msra.mxu0 0.0
    %576 = vmatprep.subr.mxu0 0.0
    %577 = vmatpush1.msra.mxu0 0.0
    %578 = vmatprep.subr.mxu0 0.0
    %579 = vmatpush1.msra.mxu0 0.0
    %580 = vmatprep.subr.mxu0 0.0
    %581 = vmatpush1.msra.mxu0 0.0
    %582 = vmatprep.subr.mxu0 0.0
    %583 = vmatpush1.msra.mxu0 0.0
    %584 = vmatprep.subr.mxu0 0.0
    %585 = vmatpush1.msra.mxu0 0.0
    %586 = vmatprep.subr.mxu0 0.0
    %587 = vmatpush1.msra.mxu0 0.0
    %588 = vmatprep.subr.mxu0 0.0
    %589 = vmatpush1.msra.mxu0 0.0
    %590 = vmatprep.subr.mxu0 0.0
    %591 = vmatpush1.msra.mxu0 0.0
    %592 = vmatprep.mubr.f32.mxu0 0.0
    %593 = vmatmul.mubr.f32.gmra.mrb[0].mxu0 %v416
    %v594 = vpop.f32.mrb[0].mxu0
    %v595 = vadd.f32 0.0, %v594
    %v596 = vpop.f32.mrb[0].mxu0
    %597 = vmatprep.mubr.f32.mxu0 0.0
    %598 = vmatmul.mubr.f32.gmra.mrb[0].mxu0 %v526
    %v599 = vpop.f32.mrb[0].mxu0
    %v600 = vadd.f32 0.0, %v599
    %v601 = vpop.f32.mrb[0].mxu0
    %602 = vdwg.mxu0
    %v603 = vmul.f32 %v595, %v47
    %vm604 = vcmask 326656
    %v605 = vsel %vm604, %v603, 0.0
    %v606 = vrot.slane %v605, 4
    %v607 = vadd.f32 %v605, %v606
    %v608 = vrot.slane %v607, 2
    %v609 = vadd.f32 %v607, %v608
    %v610 = vrot.slane %v609, 1
    %v611 = vadd.f32 %v609, %v610
    %v612 = vmul.f32 %v600, %v47
    %v613 = vsel %vm604, %v612, 0.0
    %v614 = vrot.slane %v613, 4
    %v615 = vadd.f32 %v613, %v614
    %v616 = vrot.slane %v615, 2
    %v617 = vadd.f32 %v615, %v616
    %v618 = vrot.slane %v617, 1
    %v619 = vadd.f32 %v617, %v618
    %vm620 = vcmask 1040384
    %v621 = vsel %vm620, %v611, %v619
    %v622 = vlaneseq
    %v623 = vshrl.u32 %v622, 7
    %v624 = vsub.s32 0, %v623
    %v625 = vrot.slane %v53, %v624
    %v627 = vsel %vm604, %v621, 0
    %629 = vmatprep.subr.mxu0 0.0
    %630 = vmatpush1.msra.mxu0 %v48
    %631 = vmatprep.subr.mxu0 0.0
    %632 = vmatpush1.msra.mxu0 %v49
    %633 = vmatprep.subr.mxu0 0.0
    %634 = vmatpush1.msra.mxu0 %v50
    %635 = vmatprep.subr.mxu0 0.0
    %636 = vmatpush1.msra.mxu0 %v51
    %637 = vmatprep.subr.mxu0 0.0
    %638 = vmatpush1.msra.mxu0 %v52
    %639 = vmatprep.subr.mxu0 0.0
    %640 = vmatpush1.msra.mxu0 0.0
    %641 = vmatprep.subr.mxu0 0.0
    %642 = vmatpush1.msra.mxu0 0.0
    %643 = vmatprep.subr.mxu0 0.0
    %644 = vmatpush1.msra.mxu0 0.0
    %645 = vmatprep.subr.mxu0 0.0
    %646 = vmatpush1.msra.mxu0 0.0
    %647 = vmatprep.subr.mxu0 0.0
    %648 = vmatpush1.msra.mxu0 0.0
    %649 = vmatprep.subr.mxu0 0.0
    %650 = vmatpush1.msra.mxu0 0.0
    %651 = vmatprep.subr.mxu0 0.0
    %652 = vmatpush1.msra.mxu0 0.0
    %653 = vmatprep.subr.mxu0 0.0
    %654 = vmatpush1.msra.mxu0 0.0
    %655 = vmatprep.subr.mxu0 0.0
    %656 = vmatpush1.msra.mxu0 0.0
    %657 = vmatprep.subr.mxu0 0.0
    %658 = vmatpush1.msra.mxu0 0.0
    %659 = vmatprep.subr.mxu0 0.0
    %660 = vmatpush1.msra.mxu0 0.0
    %661 = vmatprep.subr.mxu0 0.0
    %662 = vmatpush1.msra.mxu0 0.0
    %663 = vmatprep.subr.mxu0 0.0
    %664 = vmatpush1.msra.mxu0 0.0
    %665 = vmatprep.subr.mxu0 0.0
    %666 = vmatpush1.msra.mxu0 0.0
    %667 = vmatprep.subr.mxu0 0.0
    %668 = vmatpush1.msra.mxu0 0.0
    %669 = vmatprep.subr.mxu0 0.0
    %670 = vmatpush1.msra.mxu0 0.0
    %671 = vmatprep.subr.mxu0 0.0
    %672 = vmatpush1.msra.mxu0 0.0
    %673 = vmatprep.subr.mxu0 0.0
    %674 = vmatpush1.msra.mxu0 0.0
    %675 = vmatprep.subr.mxu0 0.0
    %676 = vmatpush1.msra.mxu0 0.0
    %677 = vmatprep.subr.mxu0 0.0
    %678 = vmatpush1.msra.mxu0 0.0
    %679 = vmatprep.subr.mxu0 0.0
    %680 = vmatpush1.msra.mxu0 0.0
    %681 = vmatprep.subr.mxu0 0.0
    %682 = vmatpush1.msra.mxu0 0.0
    %683 = vmatprep.subr.mxu0 0.0
    %684 = vmatpush1.msra.mxu0 0.0
    %685 = vmatprep.subr.mxu0 0.0
    %686 = vmatpush1.msra.mxu0 0.0
    %687 = vmatprep.subr.mxu0 0.0
    %688 = vmatpush1.msra.mxu0 0.0
    %689 = vmatprep.subr.mxu0 0.0
    %690 = vmatpush1.msra.mxu0 0.0
    %691 = vmatprep.subr.mxu0 0.0
    %692 = vmatpush1.msra.mxu0 0.0
    %693 = vmatprep.mubr.f32.mxu0 0.0
    %694 = vmatmul.mubr.f32.gmra.mrb[0].mxu0 %v627
    %v695 = vpop.f32.mrb[0].mxu0
    %v696 = vadd.f32 %v625, %v695
    %v697 = vpop.f32.mrb[0].mxu0
    %698 = vdwg.mxu0
    %vm699 = vcmask 33792
    %700 = vst.msk [vmem:[#allocation2] sm:$0x3] %vm699, %v696
    // Predicated region
    $region18: #{old_gru_forward.1} parent=1 // pred_check
      _
    $region19: #{old_gru_forward.1} parent=1 // pred_check_branch
      %702 = sbr.rel (0) target = $region21
    $region20: #{old_gru_forward.1} parent=1 // pred_region
      %s704 = ssub.s32 32, 32
      %705 = vsyncadd [#allocation3], %s704
      %s707 = sshll.u32 [#allocation2], 4
      %s708 = int_to_ptr.vmem [resolvable:$true] %s707
      %710 = dma.vmem_to_hbm [thread:$0]  %s708, 32, %s4, [#allocation3]
    $region21: #{old_gru_forward.1} parent=1 // pred_fallthru
      _
    // Predicated region
    $region22: #{old_gru_forward.1} parent=1 // pred_check
      _
    $region23: #{old_gru_forward.1} parent=1 // pred_check_branch
      %712 = sbr.rel (0) target = $region25
    $region24: #{old_gru_forward.1} parent=1 // pred_region
      %713 = dma.done [#allocation3], 32
    $region25: #{old_gru_forward.1} parent=1 // pred_fallthru
      _
    %714 = vsyncpa [#allocation3], 1

</llo_original>
